<compile_context>
chip_gen: v6e
topology: v6e:2x2x1
jax: 0.10.0
libtpu: 0.0.40
codegen_flags: <defaults>
</compile_context>

<pallas_src>
import functools
import math

import jax
import jax.numpy as jnp
from jax import lax
from jax.experimental import pallas as pl
from jax.experimental.pallas import tpu as pltpu


def _round_up(x, m):
    return ((x + m - 1) // m) * m


def _pick_tile(total, want):
    """Largest divisor of `total` that is <= want and a multiple of 8 (or total)."""
    want = max(1, min(want, total))
    for t in range(want, 0, -1):
        if total % t == 0 and (t % 8 == 0 or t == total):
            return t
    return total


def _device_kind():
    try:
        return jax.devices()[0].device_kind.lower()
    except Exception:
        return ""


def _vmem_capacity_bytes():
    """Physical VMEM per core, generation-aware."""
    try:
        cap = getattr(pltpu.get_tpu_info(), "vmem_capacity_bytes", None)
        if cap:
            return int(cap)
    except Exception:
        pass
    kind = _device_kind()
    if "v5" in kind or "v6" in kind:
        return 128 << 20            # v5e / v6e
    return 64 << 20                 # v7x and safe default


def _use_bf16_exp():
    # bf16 EUP exists on v6e / v7x; keep fp32 exp on v5e / unknown chips.
    kind = _device_kind()
    return ("v6" in kind) or ("v7" in kind) or ("7x" in kind)


# --------------------------- kernel 1: GN affine + QKV ---------------------------
def _make_norm_qkv_kernel():
    def kernel(x_ref, gns_ref, gnb_ref, wqkv_ref, bqkv_ref, xn_ref, qkv_ref):
        x = x_ref[0].astype(jnp.float32)                      # bf16 stream -> fp32
        xn = (x * gns_ref[0] + gnb_ref[0]).astype(jnp.bfloat16)
        xn_ref[0] = xn                                        # bf16 residual stream
        # QKV projection: bf16 MXU inputs, fp32 accumulation, [Q|K|V] lane-aligned
        # layout with the softmax scale already folded into the Q columns.
        qkv = jnp.dot(xn, wqkv_ref[...],
                      preferred_element_type=jnp.float32) + bqkv_ref[...]
        qkv_ref[0] = qkv.astype(jnp.bfloat16)
    return kernel


# ------------- kernel 2: flash attention + output projection + residual -----------
def _make_flash_attn_kernel(n_heads, dk_p, exp_dtype, recip_approx):
    def kernel(q_ref, k_ref, v_ref, xn_ref, wo_ref, bo_ref, out_ref,
               m_sc, l_sc, acc_sc):
        ki = pl.program_id(2)

        @pl.when(ki == 0)
        def _():
            m_sc[...] = jnp.full_like(m_sc, -jnp.inf)
            l_sc[...] = jnp.zeros_like(l_sc)
            acc_sc[...] = jnp.zeros_like(acc_sc)

        q = q_ref[0]          # (TQ, n_heads*dk_p) bf16, scale folded into Wq
        k = k_ref[0]          # (TK, n_heads*dk_p) bf16
        v = v_ref[0]          # (TK, n_heads*dk_p) bf16

        for h in range(n_heads):                 # static unroll; 128-aligned slices
            sl = slice(h * dk_p, (h + 1) * dk_p)
            s = lax.dot_general(q[:, sl], k[:, sl], (((1,), (1,)), ((), ())),
                                preferred_element_type=jnp.float32)     # (TQ, TK)
            m_prev = m_sc[h]                                            # (TQ, 128)
            m_new = jnp.maximum(m_prev, jnp.max(s, axis=-1, keepdims=True))
            alpha = jnp.exp(m_prev - m_new)                             # (TQ, 128)
            # exp in bf16 on v6e/v7x (bf16 EUP); p is fed to the MXU in bf16 anyway.
            p = jnp.exp((s - m_new[:, :1]).astype(exp_dtype))           # (TQ, TK)
            l_sc[h] = alpha * l_sc[h] + jnp.sum(p, axis=-1, keepdims=True,
                                                dtype=jnp.float32)
            acc_sc[h] = alpha[:, :1] * acc_sc[h] + jnp.dot(
                p.astype(jnp.bfloat16), v[:, sl],
                preferred_element_type=jnp.float32)                     # (TQ, dk_p)
            m_sc[h] = m_new

        @pl.when(ki == pl.num_programs(2) - 1)
        def _():
            # Residual (bf16 xn, upcast) + output bias; per-head projected outputs
            # accumulated directly into the resident fp32 output block (no concat,
            # no long live value chain).
            out_ref[0] = xn_ref[0].astype(jnp.float32) + bo_ref[...]    # (TQ, C_p)
            for h in range(n_heads):
                inv_l = pl.reciprocal(l_sc[h], approx=recip_approx)     # EUP, ~free
                head = (acc_sc[h] * inv_l[:, :1]).astype(jnp.bfloat16)  # (TQ, dk_p)
                out_ref[0] += jnp.dot(head, wo_ref[h * dk_p:(h + 1) * dk_p, :],
                                      preferred_element_type=jnp.float32)
    return kernel


# ----------------------- one-time parameter preprocessing -------------------------
def prepare_attention_block_params(params, *, n_heads, d_k):
    """One-time repack of AttentionBlock params into MXU-friendly layouts.

    Call ONCE and cache the result; the per-forward path only touches x.
    Layout: [Q | K | V] regions, heads at 128-aligned lane offsets, softmax scale
    folded into Q, channels zero-padded to a lane multiple, bf16 for the MXU.
    """
    gamma, beta, wp, bp, wo, bo = params
    f32, bf16 = jnp.float32, jnp.bfloat16
    C = int(wo.shape[0])
    scale = d_k ** (-0.5)
    C_p = _round_up(C, 128)
    dk_p = _round_up(d_k, 128)
    hd_p = n_heads * dk_p

    wp32, bp32 = wp.astype(f32), bp.astype(f32)
    wqkv = jnp.zeros((C_p, 3 * hd_p), f32)
    bqkv = jnp.zeros((1, 3 * hd_p), f32)
    for h in range(n_heads):
        r0 = 3 * d_k * h
        c0 = dk_p * h
        wqkv = wqkv.at[:C, c0:c0 + d_k].set(wp32[r0:r0 + d_k, :].T * scale)
        wqkv = wqkv.at[:C, hd_p + c0:hd_p + c0 + d_k].set(
            wp32[r0 + d_k:r0 + 2 * d_k, :].T)
        wqkv = wqkv.at[:C, 2 * hd_p + c0:2 * hd_p + c0 + d_k].set(
            wp32[r0 + 2 * d_k:r0 + 3 * d_k, :].T)
        bqkv = bqkv.at[0, c0:c0 + d_k].set(bp32[r0:r0 + d_k] * scale)
        bqkv = bqkv.at[0, hd_p + c0:hd_p + c0 + d_k].set(bp32[r0 + d_k:r0 + 2 * d_k])
        bqkv = bqkv.at[0, 2 * hd_p + c0:2 * hd_p + c0 + d_k].set(
            bp32[r0 + 2 * d_k:r0 + 3 * d_k])

    wo_p = jnp.zeros((hd_p, C_p), f32)
    for h in range(n_heads):
        wo_p = wo_p.at[dk_p * h:dk_p * h + d_k, :C].set(
            wo.astype(f32)[:, d_k * h:d_k * (h + 1)].T)
    bo_p = jnp.zeros((1, C_p), f32).at[0, :C].set(bo.astype(f32))

    return {
        "gamma": gamma.astype(f32), "beta": beta.astype(f32),
        "wqkv": wqkv.astype(bf16), "bqkv": bqkv,
        "wo": wo_p.astype(bf16), "bo": bo_p,
        "n_heads": n_heads, "d_k": d_k, "C": C,
        "C_p": C_p, "dk_p": dk_p, "hd_p": hd_p,
    }


# ----------------------------------- forward --------------------------------------
def attention_block_pallas(x_nchw, prepared, *, n_groups, eps=1e-5,
                           block_q=None, block_k=None, block_s=None,
                           approx_reciprocal=True):
    """Forward pass of AttentionBlock.  x_nchw: (B, C, H, W) float.

    `prepared` comes from prepare_attention_block_params (cache it across calls).
    """
    f32, bf16 = jnp.float32, jnp.bfloat16
    B, C, H, W = x_nchw.shape
    S = H * W
    n_heads = prepared["n_heads"]
    C_p, dk_p, hd_p = prepared["C_p"], prepared["dk_p"], prepared["hd_p"]
    assert prepared["C"] == C and C % n_groups == 0
    group_size = C // n_groups

    # --- generation-aware VMEM budget & tile defaults ---
    vmem_cap = _vmem_capacity_bytes()
    vmem_budget = int(0.85 * vmem_cap)
    big_vmem = vmem_cap >= (96 << 20)          # v5e/v6e: 128 MiB; v7x: 64 MiB
    if block_s is None:
        block_s = 1024 if big_vmem else 512
    if block_q is None:
        # bigger TQ halves K/V HBM re-streaming; keep >= 256 for the 256-wide MXUs.
        block_q = 512 if big_vmem else 256
    if block_k is None:
        block_k = 256

    ts = _pick_tile(S, block_s)                # kernel-1 sequence tile
    tq = _pick_tile(S, block_q)                # kernel-2 query tile
    tk = _pick_tile(S, block_k)                # kernel-2 key/value tile
    # NOTE(v7x megacore): B * (S // tq) should be >= 2 (ideally even) so both
    # TensorCores get query blocks along the "parallel" grid axes.

    # ---- GroupNorm statistics: tiny, numerically-robust two-pass XLA reduction ----
    xg = x_nchw.astype(f32).reshape(B, n_groups, group_size * H * W)
    mean = jnp.mean(xg, axis=-1)                        # (B, G)
    var = jnp.var(xg, axis=-1)                          # (B, G), biased (GroupNorm)
    inv_std = lax.rsqrt(var + eps)
    mean_c = jnp.repeat(mean, group_size, axis=1)       # (B, C)
    inv_c = jnp.repeat(inv_std, group_size, axis=1)     # (B, C)
    gscale = inv_c * prepared["gamma"][None, :]
    gshift = prepared["beta"][None, :] - mean_c * gscale
    gscale_p = jnp.zeros((B, 1, C_p), f32).at[:, 0, :C].set(gscale)
    gshift_p = jnp.zeros((B, 1, C_p), f32).at[:, 0, :C].set(gshift)

    # ---- layout glue: NCHW -> (B, S, C_p) channels-last, bf16 (halves the HBM
    #      round trip of this XLA transpose; GN stats above stay fp32) ----
    x_bsc = jnp.transpose(x_nchw.astype(bf16).reshape(B, C, S), (0, 2, 1))
    x_bsc = jnp.pad(x_bsc, ((0, 0), (0, 0), (0, C_p - C)))

    wqkv, bqkv = prepared["wqkv"], prepared["bqkv"]
    wo_p, bo_p = prepared["wo"], prepared["bo"]

    # ---------------- kernel 1: GroupNorm affine + QKV projection ----------------
    need1 = 2 * (ts * C_p * 2 + 2 * C_p * 4 + C_p * 3 * hd_p * 2 + 3 * hd_p * 4
                 + ts * C_p * 2 + ts * 3 * hd_p * 2)
    vmem1 = min(vmem_budget, max(32 << 20, need1 + (16 << 20)))
    xn, qkv = pl.pallas_call(
        _make_norm_qkv_kernel(),
        out_shape=(jax.ShapeDtypeStruct((B, S, C_p), bf16),
                   jax.ShapeDtypeStruct((B, S, 3 * hd_p), bf16)),
        grid=(B, S // ts),
        in_specs=[
            pl.BlockSpec((1, ts, C_p), lambda b, s: (b, s, 0)),       # x block (bf16)
            pl.BlockSpec((1, 1, C_p), lambda b, s: (b, 0, 0)),        # GN scale
            pl.BlockSpec((1, 1, C_p), lambda b, s: (b, 0, 0)),        # GN shift
            pl.BlockSpec((C_p, 3 * hd_p), lambda b, s: (0, 0)),       # Wqkv (resident)
            pl.BlockSpec((1, 3 * hd_p), lambda b, s: (0, 0)),         # bqkv (resident)
        ],
        out_specs=(
            pl.BlockSpec((1, ts, C_p), lambda b, s: (b, s, 0)),       # xn (bf16)
            pl.BlockSpec((1, ts, 3 * hd_p), lambda b, s: (b, s, 0)),  # qkv [Q|K|V]
        ),
        compiler_params=pltpu.CompilerParams(
            dimension_semantics=("parallel", "parallel"),
            vmem_limit_bytes=vmem1),
    )(x_bsc, gscale_p, gshift_p, wqkv, bqkv)

    # ---------- kernel 2: flash attention + output projection + residual ----------
    exp_dtype = bf16 if _use_bf16_exp() else f32
    need2 = (2 * (tq * hd_p * 2 + 2 * tk * hd_p * 2 + tq * C_p * 2
                  + hd_p * C_p * 2 + C_p * 4 + tq * C_p * 4)
             + n_heads * (2 * tq * 128 * 4 + tq * dk_p * 4))
    vmem2 = min(vmem_budget, max(32 << 20, need2 + (16 << 20)))
    out_bsc = pl.pallas_call(
        _make_flash_attn_kernel(n_heads, dk_p, exp_dtype, approx_reciprocal),
        out_shape=jax.ShapeDtypeStruct((B, S, C_p), f32),
        grid=(B, S // tq, S // tk),
        in_specs=[
            pl.BlockSpec((1, tq, hd_p), lambda b, qi, ki: (b, qi, 0)),  # Q region
            pl.BlockSpec((1, tk, hd_p), lambda b, qi, ki: (b, ki, 1)),  # K region
            pl.BlockSpec((1, tk, hd_p), lambda b, qi, ki: (b, ki, 2)),  # V region
            pl.BlockSpec((1, tq, C_p), lambda b, qi, ki: (b, qi, 0)),   # xn residual
            pl.BlockSpec((hd_p, C_p), lambda b, qi, ki: (0, 0)),        # Wo^T (resident)
            pl.BlockSpec((1, C_p), lambda b, qi, ki: (0, 0)),           # bo (resident)
        ],
        out_specs=pl.BlockSpec((1, tq, C_p), lambda b, qi, ki: (b, qi, 0)),
        scratch_shapes=[
            pltpu.VMEM((n_heads, tq, 128), f32),     # running row max (lane-replicated)
            pltpu.VMEM((n_heads, tq, 128), f32),     # running denom (lane-replicated)
            pltpu.VMEM((n_heads, tq, dk_p), f32),    # running numerator (per head)
        ],
        compiler_params=pltpu.CompilerParams(
            dimension_semantics=("parallel", "parallel", "arbitrary"),
            vmem_limit_bytes=vmem2),
    )(qkv, qkv, qkv, xn, wo_p, bo_p)

    # glue: (B, S, C_p) -> NCHW, drop channel padding, restore input dtype
    out = jnp.transpose(out_bsc[:, :, :C], (0, 2, 1)).reshape(B, C, H, W)
    return out.astype(x_nchw.dtype)


def attention_block_forward(x_nchw, params, *, n_heads, d_k, n_groups, eps=1e-5, **kw):
    """Convenience wrapper: prepares weights then runs the forward (prefer caching
    prepare_attention_block_params() outside a repeated-call loop)."""
    prepared = prepare_attention_block_params(params, n_heads=n_heads, d_k=d_k)
    return attention_block_pallas(x_nchw, prepared, n_groups=n_groups, eps=eps, **kw)


# ----------------------------------- reference ------------------------------------
def attention_block_reference(x_nchw, params, *, n_heads, d_k, n_groups, eps=1e-5):
    """Pure-JAX fp32 reference mirroring the PyTorch forward (eval mode)."""
    gamma, beta, wp, bp, wo, bo = params
    B, C, H, W = x_nchw.shape
    S = H * W
    scale = d_k ** (-0.5)
    xg = x_nchw.reshape(B, n_groups, C // n_groups * H * W)
    mean = xg.mean(axis=-1, keepdims=True)
    var = xg.var(axis=-1, keepdims=True)
    xn = ((xg - mean) / jnp.sqrt(var + eps)).reshape(B, C, H, W)
    xn = xn * gamma.reshape(1, C, 1, 1) + beta.reshape(1, C, 1, 1)
    x = jnp.transpose(xn.reshape(B, C, S), (0, 2, 1))                    # (B, S, C)
    qkv = (x @ wp.T + bp).reshape(B, S, n_heads, 3 * d_k)
    q, k, v = jnp.split(qkv, 3, axis=-1)
    attn = jnp.einsum('bihd,bjhd->bijh', q, k) * scale
    attn = jax.nn.softmax(attn, axis=2)
    res = jnp.einsum('bijh,bjhd->bihd', attn, v).reshape(B, S, n_heads * d_k)
    res = res @ wo.T + bo
    res = res + x
    return jnp.transpose(res, (0, 2, 1)).reshape(B, C, H, W)


if __name__ == "__main__":
    B, C, H, W = 2, 64, 8, 8
    n_groups = 32
    key = jax.random.PRNGKey(0)

    def make_params(k, n_heads, d_k):
        hd = n_heads * d_k
        kg, kb, k1, k2, k3, k4 = jax.random.split(k, 6)
        gamma = 1.0 + 0.1 * jax.random.normal(kg, (C,), jnp.float32)     # GN weight
        beta = 0.1 * jax.random.normal(kb, (C,), jnp.float32)            # GN bias
        bound_p = 1.0 / math.sqrt(C)
        wp = jax.random.uniform(k1, (3 * hd, C), jnp.float32, -bound_p, bound_p)
        bp = jax.random.uniform(k2, (3 * hd,), jnp.float32, -bound_p, bound_p)
        bound_o = 1.0 / math.sqrt(hd)
        wo = jax.random.uniform(k3, (C, hd), jnp.float32, -bound_o, bound_o)
        bo = jax.random.uniform(k4, (C,), jnp.float32, -bound_o, bound_o)
        return (gamma, beta, wp, bp, wo, bo)

    kx, kp1, kp2 = jax.random.split(key, 3)
    x = jax.random.normal(kx, (B, C, H, W), dtype=jnp.float32)

    # Config 1: module defaults (n_heads=1, d_k=C).  Small tiles so the demo
    # actually exercises the (batch, q-block, kv-block) pipeline.
    params1 = make_params(kp1, 1, C)
    prep1 = prepare_attention_block_params(params1, n_heads=1, d_k=C)   # one-time
    run1 = functools.partial(attention_block_pallas, n_groups=n_groups,
                             block_q=32, block_k=32, block_s=32)
    out1 = jax.block_until_ready(run1(x, prep1))
    ref1 = attention_block_reference(x, params1, n_heads=1, d_k=C, n_groups=n_groups)
    assert out1.shape == (B, C, H, W)
    err1 = float(jnp.max(jnp.abs(out1 - ref1)))
    assert err1 < 5e-2, f"config1 max abs error too large: {err1}"

    # Config 2: multi-head (n_heads=2, d_k=32) exercises the per-head loop / slices.
    params2 = make_params(kp2, 2, 32)
    prep2 = prepare_attention_block_params(params2, n_heads=2, d_k=32)
    out2 = jax.block_until_ready(run1(x, prep2))
    ref2 = attention_block_reference(x, params2, n_heads=2, d_k=32, n_groups=n_groups)
    err2 = float(jnp.max(jnp.abs(out2 - ref2)))
    assert err2 < 5e-2, f"config2 max abs error too large: {err2}"

    print("KERNEL_OK")
</pallas_src>

<mosaic_0001>
module attributes {stable_mosaic.version = 11 : i64} {
  func.func @kernel(%arg0: i32, %arg1: i32, %arg2: memref<1x32x128xbf16, #tpu.memory_space<vmem>>, %arg3: memref<1x1x128xf32, #tpu.memory_space<vmem>>, %arg4: memref<1x1x128xf32, #tpu.memory_space<vmem>>, %arg5: memref<128x384xbf16, #tpu.memory_space<vmem>>, %arg6: memref<1x384xf32, #tpu.memory_space<vmem>>, %arg7: memref<1x32x128xbf16, #tpu.memory_space<vmem>>, %arg8: memref<1x32x384xbf16, #tpu.memory_space<vmem>>) attributes {dimension_semantics = [#tpu.dimension_semantics<parallel>, #tpu.dimension_semantics<parallel>], iteration_bounds = array<i64: 2, 2>, scalar_prefetch = 0 : i64, scratch_operands = 0 : i64, tpu.core_type = #tpu.core_type<tc>, window_params = [{transform_indices = @transform_0, window_bounds = array<i64: 1, 32, 128>}, {transform_indices = @transform_1, window_bounds = array<i64: 1, 1, 128>}, {transform_indices = @transform_2, window_bounds = array<i64: 1, 1, 128>}, {pipeline_mode = #tpu.pipeline_mode<synchronous>, transform_indices = @transform_3, window_bounds = array<i64: 128, 384>}, {pipeline_mode = #tpu.pipeline_mode<synchronous>, transform_indices = @transform_4, window_bounds = array<i64: 1, 384>}, {transform_indices = @transform_5, window_bounds = array<i64: 1, 32, 128>}, {transform_indices = @transform_6, window_bounds = array<i64: 1, 32, 384>}]} {
    %c0 = arith.constant 0 : index
    %c0_0 = arith.constant 0 : index
    %c0_1 = arith.constant 0 : index
    %0 = vector.load %arg2[%c0, %c0_0, %c0_1] : memref<1x32x128xbf16, #tpu.memory_space<vmem>>, vector<1x32x128xbf16>
    %1 = vector.shape_cast %0 : vector<1x32x128xbf16> to vector<32x128xbf16>
    %2 = arith.extf %1 : vector<32x128xbf16> to vector<32x128xf32>
    %c0_2 = arith.constant 0 : index
    %c0_3 = arith.constant 0 : index
    %c0_4 = arith.constant 0 : index
    %3 = vector.load %arg3[%c0_2, %c0_3, %c0_4] : memref<1x1x128xf32, #tpu.memory_space<vmem>>, vector<1x1x128xf32>
    %4 = vector.shape_cast %3 : vector<1x1x128xf32> to vector<1x128xf32>
    %5 = vector.broadcast %4 : vector<1x128xf32> to vector<32x128xf32>
    %6 = arith.mulf %2, %5 : vector<32x128xf32>
    %c0_5 = arith.constant 0 : index
    %c0_6 = arith.constant 0 : index
    %c0_7 = arith.constant 0 : index
    %7 = vector.load %arg4[%c0_5, %c0_6, %c0_7] : memref<1x1x128xf32, #tpu.memory_space<vmem>>, vector<1x1x128xf32>
    %8 = vector.shape_cast %7 : vector<1x1x128xf32> to vector<1x128xf32>
    %9 = vector.broadcast %8 : vector<1x128xf32> to vector<32x128xf32>
    %10 = arith.addf %6, %9 : vector<32x128xf32>
    %11 = arith.truncf %10 : vector<32x128xf32> to vector<32x128xbf16>
    %c0_8 = arith.constant 0 : index
    %c0_9 = arith.constant 0 : index
    %c0_10 = arith.constant 0 : index
    %12 = vector.load %arg7[%c0_8, %c0_9, %c0_10] : memref<1x32x128xbf16, #tpu.memory_space<vmem>>, vector<1x32x128xbf16>
    %13 = vector.shape_cast %12 : vector<1x32x128xbf16> to vector<32x128xbf16>
    %14 = vector.shape_cast %11 : vector<32x128xbf16> to vector<1x32x128xbf16>
    tpu.vector_store %arg7[%c0_8, %c0_9, %c0_10], %14 {strides = array<i32>} : memref<1x32x128xbf16, #tpu.memory_space<vmem>>, vector<1x32x128xbf16>,
    %c0_11 = arith.constant 0 : index
    %c0_12 = arith.constant 0 : index
    %15 = vector.load %arg5[%c0_11, %c0_12] : memref<128x384xbf16, #tpu.memory_space<vmem>>, vector<128x384xbf16>
    %cst = arith.constant dense<0.000000e+00> : vector<32x384xf32>
    %16 = tpu.matmul %11, %15, %cst {dimension_numbers = #tpu.dot_dimension_numbers<[1], [0], [0], [1], [0, 0, 1, 1], [], []>} : vector<32x128xbf16>, vector<128x384xbf16>, vector<32x384xf32> -> vector<32x384xf32>
    %c0_13 = arith.constant 0 : index
    %c0_14 = arith.constant 0 : index
    %17 = vector.load %arg6[%c0_13, %c0_14] : memref<1x384xf32, #tpu.memory_space<vmem>>, vector<1x384xf32>
    %18 = vector.broadcast %17 : vector<1x384xf32> to vector<32x384xf32>
    %19 = arith.addf %16, %18 : vector<32x384xf32>
    %20 = arith.truncf %19 : vector<32x384xf32> to vector<32x384xbf16>
    %c0_15 = arith.constant 0 : index
    %c0_16 = arith.constant 0 : index
    %c0_17 = arith.constant 0 : index
    %21 = vector.load %arg8[%c0_15, %c0_16, %c0_17] : memref<1x32x384xbf16, #tpu.memory_space<vmem>>, vector<1x32x384xbf16>
    %22 = vector.shape_cast %21 : vector<1x32x384xbf16> to vector<32x384xbf16>
    %23 = vector.shape_cast %20 : vector<32x384xbf16> to vector<1x32x384xbf16>
    tpu.vector_store %arg8[%c0_15, %c0_16, %c0_17], %23 {strides = array<i32>} : memref<1x32x384xbf16, #tpu.memory_space<vmem>>, vector<1x32x384xbf16>,
    return
  }
  func.func @transform_0(%arg0: i32, %arg1: i32) -> (i32, i32, i32) {
    %c0_i32 = arith.constant 0 : i32
    %c0_i32_0 = arith.constant 0 : i32
    return %arg0, %arg1, %c0_i32 : i32, i32, i32
  }
  func.func @transform_1(%arg0: i32, %arg1: i32) -> (i32, i32, i32) {
    %c0_i32 = arith.constant 0 : i32
    %c0_i32_0 = arith.constant 0 : i32
    %c0_i32_1 = arith.constant 0 : i32
    return %arg0, %c0_i32, %c0_i32_0 : i32, i32, i32
  }
  func.func @transform_2(%arg0: i32, %arg1: i32) -> (i32, i32, i32) {
    %c0_i32 = arith.constant 0 : i32
    %c0_i32_0 = arith.constant 0 : i32
    %c0_i32_1 = arith.constant 0 : i32
    return %arg0, %c0_i32, %c0_i32_0 : i32, i32, i32
  }
  func.func @transform_3(%arg0: i32, %arg1: i32) -> (i32, i32) {
    %c0_i32 = arith.constant 0 : i32
    %c0_i32_0 = arith.constant 0 : i32
    %c0_i32_1 = arith.constant 0 : i32
    return %c0_i32, %c0_i32_0 : i32, i32
  }
  func.func @transform_4(%arg0: i32, %arg1: i32) -> (i32, i32) {
    %c0_i32 = arith.constant 0 : i32
    %c0_i32_0 = arith.constant 0 : i32
    %c0_i32_1 = arith.constant 0 : i32
    return %c0_i32, %c0_i32_0 : i32, i32
  }
  func.func @transform_5(%arg0: i32, %arg1: i32) -> (i32, i32, i32) {
    %c0_i32 = arith.constant 0 : i32
    %c0_i32_0 = arith.constant 0 : i32
    return %arg0, %arg1, %c0_i32 : i32, i32, i32
  }
  func.func @transform_6(%arg0: i32, %arg1: i32) -> (i32, i32, i32) {
    %c0_i32 = arith.constant 0 : i32
    %c0_i32_0 = arith.constant 0 : i32
    return %arg0, %arg1, %c0_i32 : i32, i32, i32
  }
}

</mosaic_0001>

<llo_original>
// kernel: tpu_custom_call.1
$region0: #{tpu_custom_call.1}
  #allocation0 [shape = 'u32[]', space=smem, size = 0x4, offset = 0x4, fixed_abs, tag = 'smem constant byte address 0x4 - core index']
  #allocation1 [shape = 'u32[144,128]{1,0:T(1,128)}', space=vmem, size = 0x12000, scoped, tag = 'internal scratch']
  %s0 = inlined_call_operand.hbm [shape: bf16[2,64,128], index: 0, kind: input, shape index: {}]
  %s1 = inlined_call_operand.hbm [shape: f32[2,1,128], index: 1, kind: input, shape index: {}]
  %s2 = inlined_call_operand.vmem [shape: f32[2,1,128], index: 2, kind: input, shape index: {}]
  %s3 = inlined_call_operand.hbm [shape: bf16[128,384], index: 3, kind: input, shape index: {}]
  %s4 = inlined_call_operand.vmem [shape: f32[1,384], index: 4, kind: input, shape index: {}]
  %s5 = inlined_call_operand.hbm [shape: bf16[2,64,128], index: 5, kind: output, shape index: {0}]
  %s6 = inlined_call_operand.hbm [shape: bf16[2,64,384], index: 6, kind: output, shape index: {1}]
  %7 = xla_tuple %s5, %s6
  %s8 = sld [smem:[#allocation0]]
  $region73: #{tpu_custom_call.1} parent=0
    _
  %s10 = ssub.s32 1, %s8
  %s11 = scalar_select 0, %s10, %s8
  $region1: #{tpu_custom_call.1} parent=0
    #allocation2 [shape = 'u8[16384]{0}', space=vmem, size = 0x4000, scoped, tag = 'input window, operand 0']
    #allocation3 [shape = 's32[2]{0}', space=sflag, size = 0x8, scoped, tag = 'scoped memory for tpu_custom_call.1']
    #allocation4 [shape = 's32[2]{0}', space=sflag, size = 0x8, scoped, tag = 'scoped memory for tpu_custom_call.1']
    #allocation5 [shape = 'u8[1024]{0}', space=vmem, size = 0x400, scoped, tag = 'input window, operand 1']
    #allocation6 [shape = 's32[2]{0}', space=sflag, size = 0x8, scoped, tag = 'scoped memory for tpu_custom_call.1']
    #allocation7 [shape = 'u8[98304]{0}', space=vmem, size = 0x18000, scoped, tag = 'input window, operand 3, single buffered']
    #allocation8 [shape = 'u8[16384]{0}', space=vmem, size = 0x4000, scoped, tag = 'output window, operand 0']
    #allocation9 [shape = 'u8[49152]{0}', space=vmem, size = 0xc000, scoped, tag = 'output window, operand 1']
    #allocation10 [shape = 's32[2]{0}', space=sflag, size = 0x8, scoped, tag = 'scoped memory for tpu_custom_call.1']
    %12 = vsyncpa [#allocation3], 0
    %s13 = scalar_lea.sflag [#allocation3], 1
    %14 = vsyncpa %s13, 0
    %15 = vsyncpa [#allocation6], 0
    %s16 = scalar_lea.sflag [#allocation6], 1
    %17 = vsyncpa %s16, 0
    %18 = vsyncpa [#allocation4], 0
    %s19 = scalar_lea.sflag [#allocation4], 1
    %20 = vsyncpa %s19, 0
    %21 = vsyncpa [#allocation10], 0
    %s22 = scalar_lea.sflag [#allocation10], 1
    %23 = vsyncpa %s22, 0
    loop: start=0, step=1, limit=6
    $region2: #{tpu_custom_call.1} parent=1 // loop_pre_header
      _
    $region3: #{tpu_custom_call.1} parent=1 // loop_header
      %s25 = sphi 0, %s29
      %p26 = scmp.ge.s32.totalorder %s25, 6
      %s32 = sphi 0, %s44
      %s33 = sphi 0, %s40
      %s34 = sphi 0, %s32
      %s35 = sphi 0, %s33
      %s36 = sphi 0, %s34
      %s37 = sphi 0, %s35
      %s49 = sphi 0, %s51
      %s52 = sphi 0, %s49
      %s53 = sphi 0, %s52
      %s69 = sphi 0, %s53
      %s75 = sphi 0, %s77
      %s78 = sphi 0, %s75
      %s79 = sphi 0, %s78
      %s95 = sphi 0, %s79
      %s101 = sphi 0, %s103
      %s104 = sphi 0, %s101
      %s105 = sphi 0, %s104
      %s121 = sphi 0, %s105
      %s125 = sphi 0, %s125
      %s127 = sphi 0, %s125
      %s128 = sphi 0, %s127
      %s142 = sphi 0, %s128
      %s146 = sphi 0, %s146
      %s148 = sphi 0, %s146
      %s149 = sphi 0, %s148
      %s163 = sphi 0, %s149
      %s171 = sphi 0, %s173
      %s174 = sphi 0, %s171
      %s175 = sphi 0, %s174
      %s191 = sphi 0, %s175
      %s199 = sphi 0, %s201
      %s202 = sphi 0, %s199
      %s203 = sphi 0, %s202
      %s219 = sphi 0, %s203
    $region4: #{tpu_custom_call.1} parent=1 // loop_header_branch
      %28 = sbr.rel (%p26) target = $region8
    $region5: #{tpu_custom_call.1} parent=1 // loop_body
      %s30 = ssub.s32 %s25, 1
      %s31 = ssub.s32 %s25, 2
      %s38 = sadd.s32 1, %s33
      %p39 = scmp.ge.s32.totalorder %s38, 2
      %s40 = scalar_select %p39, 0, %s38
      %s41 = sadd.s32 1, %s32
      %s42 = scalar_select %p39, %s41, %s32
      %p43 = scmp.ge.s32.totalorder %s42, 2
      %s44 = scalar_select %p43, 0, %s42
      %s45 = ssub.s32 %s32, %s44
      %s46 = ssub.s32 %s33, %s40
      %s47 = sor.u32 %s45, %s46
      %p48 = scmp.eq.s32.totalorder %s47, 0
      %s50 = sadd.s32 %s49, 1
      %s51 = scalar_select %p48, %s49, %s50
      %p54 = pneg %p48
      %p55 = scmp.eq.s32.totalorder %s25, 3
      %p56 = por %p54, %p55
      %p57 = scmp.ne.s32.totalorder %s49, %s52
      %p58 = scmp.eq.s32.totalorder %s25, 0
      %p59 = por %p57, %p58
      %p60 = scmp.ne.s32.totalorder %s49, %s52
      %p61 = scmp.eq.s32.totalorder %s30, 3
      %p62 = por %p60, %p61
      %p63 = scmp.ne.s32.totalorder %s52, %s53
      %p64 = scmp.eq.s32.totalorder %s30, 0
      %p65 = por %p63, %p64
      %p66 = scmp.ne.s32.totalorder %s52, %s53
      %p67 = scmp.eq.s32.totalorder %s31, 3
      %p68 = por %p66, %p67
      %p70 = scmp.ne.s32.totalorder %s53, %s69
      %p71 = scmp.eq.s32.totalorder %s31, 0
      %p72 = por %p70, %p71
      %s73 = ssub.s32 %s32, %s44
      %p74 = scmp.eq.s32.totalorder %s73, 0
      %s76 = sadd.s32 %s75, 1
      %s77 = scalar_select %p74, %s75, %s76
      %p80 = pneg %p74
      %p81 = scmp.eq.s32.totalorder %s25, 3
      %p82 = por %p80, %p81
      %p83 = scmp.ne.s32.totalorder %s75, %s78
      %p84 = scmp.eq.s32.totalorder %s25, 0
      %p85 = por %p83, %p84
      %p86 = scmp.ne.s32.totalorder %s75, %s78
      %p87 = scmp.eq.s32.totalorder %s30, 3
      %p88 = por %p86, %p87
      %p89 = scmp.ne.s32.totalorder %s78, %s79
      %p90 = scmp.eq.s32.totalorder %s30, 0
      %p91 = por %p89, %p90
      %p92 = scmp.ne.s32.totalorder %s78, %s79
      %p93 = scmp.eq.s32.totalorder %s31, 3
      %p94 = por %p92, %p93
      %p96 = scmp.ne.s32.totalorder %s79, %s95
      %p97 = scmp.eq.s32.totalorder %s31, 0
      %p98 = por %p96, %p97
      %s99 = ssub.s32 %s32, %s44
      %p100 = scmp.eq.s32.totalorder %s99, 0
      %s102 = sadd.s32 %s101, 1
      %s103 = scalar_select %p100, %s101, %s102
      %p106 = pneg %p100
      %p107 = scmp.eq.s32.totalorder %s25, 3
      %p108 = por %p106, %p107
      %p109 = scmp.ne.s32.totalorder %s101, %s104
      %p110 = scmp.eq.s32.totalorder %s25, 0
      %p111 = por %p109, %p110
      %p112 = scmp.ne.s32.totalorder %s101, %s104
      %p113 = scmp.eq.s32.totalorder %s30, 3
      %p114 = por %p112, %p113
      %p115 = scmp.ne.s32.totalorder %s104, %s105
      %p116 = scmp.eq.s32.totalorder %s30, 0
      %p117 = por %p115, %p116
      %p118 = scmp.ne.s32.totalorder %s104, %s105
      %p119 = scmp.eq.s32.totalorder %s31, 3
      %p120 = por %p118, %p119
      %p122 = scmp.ne.s32.totalorder %s105, %s121
      %p123 = scmp.eq.s32.totalorder %s31, 0
      %p124 = por %p122, %p123
      %s126 = sadd.s32 %s125, 1
      %p129 = scmp.eq.s32.totalorder %s25, 3
      %p130 = scmp.ne.s32.totalorder %s125, %s127
      %p131 = scmp.eq.s32.totalorder %s25, 0
      %p132 = por %p130, %p131
      %p133 = scmp.ne.s32.totalorder %s125, %s127
      %p134 = scmp.eq.s32.totalorder %s30, 3
      %p135 = por %p133, %p134
      %p136 = scmp.ne.s32.totalorder %s127, %s128
      %p137 = scmp.eq.s32.totalorder %s30, 0
      %p138 = por %p136, %p137
      %p139 = scmp.ne.s32.totalorder %s127, %s128
      %p140 = scmp.eq.s32.totalorder %s31, 3
      %p141 = por %p139, %p140
      %p143 = scmp.ne.s32.totalorder %s128, %s142
      %p144 = scmp.eq.s32.totalorder %s31, 0
      %p145 = por %p143, %p144
      %s147 = sadd.s32 %s146, 1
      %p150 = scmp.eq.s32.totalorder %s25, 3
      %p151 = scmp.ne.s32.totalorder %s146, %s148
      %p152 = scmp.eq.s32.totalorder %s25, 0
      %p153 = por %p151, %p152
      %p154 = scmp.ne.s32.totalorder %s146, %s148
      %p155 = scmp.eq.s32.totalorder %s30, 3
      %p156 = por %p154, %p155
      %p157 = scmp.ne.s32.totalorder %s148, %s149
      %p158 = scmp.eq.s32.totalorder %s30, 0
      %p159 = por %p157, %p158
      %p160 = scmp.ne.s32.totalorder %s148, %s149
      %p161 = scmp.eq.s32.totalorder %s31, 3
      %p162 = por %p160, %p161
      %p164 = scmp.ne.s32.totalorder %s149, %s163
      %p165 = scmp.eq.s32.totalorder %s31, 0
      %p166 = por %p164, %p165
      %s167 = ssub.s32 %s32, %s44
      %s168 = ssub.s32 %s33, %s40
      %s169 = sor.u32 %s167, %s168
      %p170 = scmp.eq.s32.totalorder %s169, 0
      %s172 = sadd.s32 %s171, 1
      %s173 = scalar_select %p170, %s171, %s172
      %p176 = pneg %p170
      %p177 = scmp.eq.s32.totalorder %s25, 3
      %p178 = por %p176, %p177
      %p179 = scmp.ne.s32.totalorder %s171, %s174
      %p180 = scmp.eq.s32.totalorder %s25, 0
      %p181 = por %p179, %p180
      %p182 = scmp.ne.s32.totalorder %s171, %s174
      %p183 = scmp.eq.s32.totalorder %s30, 3
      %p184 = por %p182, %p183
      %p185 = scmp.ne.s32.totalorder %s174, %s175
      %p186 = scmp.eq.s32.totalorder %s30, 0
      %p187 = por %p185, %p186
      %p188 = scmp.ne.s32.totalorder %s174, %s175
      %p189 = scmp.eq.s32.totalorder %s31, 3
      %p190 = por %p188, %p189
      %p192 = scmp.ne.s32.totalorder %s175, %s191
      %p193 = scmp.eq.s32.totalorder %s31, 0
      %p194 = por %p192, %p193
      %s195 = ssub.s32 %s32, %s44
      %s196 = ssub.s32 %s33, %s40
      %s197 = sor.u32 %s195, %s196
      %p198 = scmp.eq.s32.totalorder %s197, 0
      %s200 = sadd.s32 %s199, 1
      %s201 = scalar_select %p198, %s199, %s200
      %p204 = pneg %p198
      %p205 = scmp.eq.s32.totalorder %s25, 3
      %p206 = por %p204, %p205
      %p207 = scmp.ne.s32.totalorder %s199, %s202
      %p208 = scmp.eq.s32.totalorder %s25, 0
      %p209 = por %p207, %p208
      %p210 = scmp.ne.s32.totalorder %s199, %s202
      %p211 = scmp.eq.s32.totalorder %s30, 3
      %p212 = por %p210, %p211
      %p213 = scmp.ne.s32.totalorder %s202, %s203
      %p214 = scmp.eq.s32.totalorder %s30, 0
      %p215 = por %p213, %p214
      %p216 = scmp.ne.s32.totalorder %s202, %s203
      %p217 = scmp.eq.s32.totalorder %s31, 3
      %p218 = por %p216, %p217
      %p220 = scmp.ne.s32.totalorder %s203, %s219
      %p221 = scmp.eq.s32.totalorder %s31, 0
      %p222 = por %p220, %p221
      %p223 = scmp.le.s32.totalorder 1, %s25
      %p224 = scmp.lt.s32.totalorder %s25, 5
      %p225 = pnand %p223, %p224
      %p226 = pneg %p225
      // Predicated region
      $region9: #{tpu_custom_call.1} parent=5 // pred_check
        _
      $region10: #{tpu_custom_call.1} parent=5 // pred_check_branch
        %228 = sbr.rel (%p225) target = $region12
      $region11: #{tpu_custom_call.1} parent=5 // pred_region
        %s229 = ssub.s32 %s25, 1
        // Predicated region
        $region13: #{tpu_custom_call.1} parent=11 // pred_check
          %p230 = pneg %p138
        $region14: #{tpu_custom_call.1} parent=11 // pred_check_branch
          %232 = sbr.rel (%p230) target = $region16
        $region15: #{tpu_custom_call.1} parent=11 // pred_region
          %s234 = ssub.s32 3072, 3072
          %235 = vsyncadd [#allocation6], %s234
          %s236 = sshll.u32 [#allocation7], 4
          %s237 = int_to_ptr.vmem [resolvable:$true] %s236
          %242 = dma.hbm_to_vmem [thread:$0]  %s3, 3072, %s237, [#allocation6], 192, 192, 12
        $region16: #{tpu_custom_call.1} parent=11 // pred_fallthru
          _
        // Predicated region
        $region17: #{tpu_custom_call.1} parent=11 // pred_check
          %p243 = pneg %p159
        $region18: #{tpu_custom_call.1} parent=11 // pred_check_branch
          %245 = sbr.rel (%p243) target = $region20
        $region19: #{tpu_custom_call.1} parent=11 // pred_region
          _
        $region20: #{tpu_custom_call.1} parent=11 // pred_fallthru
          _
      $region12: #{tpu_custom_call.1} parent=5 // pred_fallthru
        _
      %p246 = scmp.lt.s32.totalorder %s25, 4
      // Predicated region
      $region21: #{tpu_custom_call.1} parent=5 // pred_check
        %p247 = pneg %p246
      $region22: #{tpu_custom_call.1} parent=5 // pred_check_branch
        %249 = sbr.rel (%p247) target = $region24
      $region23: #{tpu_custom_call.1} parent=5 // pred_region
        // Predicated region
        $region25: #{tpu_custom_call.1} parent=23 // pred_check
          %p250 = pneg %p59
        $region26: #{tpu_custom_call.1} parent=23 // pred_check_branch
          %252 = sbr.rel (%p250) target = $region28
        $region27: #{tpu_custom_call.1} parent=23 // pred_region
          %s253 = sand.u32 %s49, 1
          %s254 = scalar_lea.sflag [#allocation3], %s253
          %s255 = sand.u32 %s49, 1
          %s256 = smul.addr %s255, 16
          %s257 = scalar_lea.vmem [#allocation2], %s256
          %s258 = smul.u32 4, %s33
          %s260 = ssub.s32 256, 256
          %261 = vsyncadd %s254, %s260
          %s262 = smul.addr %s32, 8
          %s263 = sadd.s32 %s258, %s262
          %s264 = smul.addr %s263, 64
          %s265 = scalar_lea.hbm %s0, %s264
          %s266 = sshll.u32 %s257, 4
          %s267 = int_to_ptr.vmem [resolvable:$true] %s266
          %272 = dma.hbm_to_vmem [thread:$0]  %s265, 256, %s267, %s254, 64, 64, 4
        $region28: #{tpu_custom_call.1} parent=23 // pred_fallthru
          _
        // Predicated region
        $region29: #{tpu_custom_call.1} parent=23 // pred_check
          %p273 = pneg %p85
        $region30: #{tpu_custom_call.1} parent=23 // pred_check_branch
          %275 = sbr.rel (%p273) target = $region32
        $region31: #{tpu_custom_call.1} parent=23 // pred_region
          %s276 = sand.u32 %s25, 1
          %s277 = scalar_lea.sflag [#allocation6], %s276
          %s278 = sand.u32 %s75, 1
          %s279 = scalar_lea.vmem [#allocation5], %s278
          %s281 = ssub.s32 16, 16
          %282 = vsyncadd %s277, %s281
          %s283 = smul.addr %s32, 16
          %s284 = scalar_lea.hbm %s1, %s283
          %s286 = sshll.u32 %s279, 4
          %s287 = int_to_ptr.vmem [resolvable:$true] %s286
          %289 = dma.hbm_to_vmem [thread:$0]  %s284, 16, %s287, %s277
        $region32: #{tpu_custom_call.1} parent=23 // pred_fallthru
          _
        // Predicated region
        $region33: #{tpu_custom_call.1} parent=23 // pred_check
          %p290 = pneg %p111
        $region34: #{tpu_custom_call.1} parent=23 // pred_check_branch
          %292 = sbr.rel (%p290) target = $region36
        $region35: #{tpu_custom_call.1} parent=23 // pred_region
          %p293 = scmp.lt.s32.totalorder %s32, 1
          %s294 = scalar_select %p293, %s32, 1
          %s295 = scalar_lea.vmem %s2, %s294
        $region36: #{tpu_custom_call.1} parent=23 // pred_fallthru
          _
      $region24: #{tpu_custom_call.1} parent=5 // pred_fallthru
        _
      %p296 = scmp.le.s32.totalorder 1, %s25
      %p297 = scmp.lt.s32.totalorder %s25, 5
      %p298 = pnand %p296, %p297
      %p299 = pneg %p298
      // Predicated region
      $region37: #{tpu_custom_call.1} parent=5 // pred_check
        _
      $region38: #{tpu_custom_call.1} parent=5 // pred_check_branch
        %301 = sbr.rel (%p298) target = $region40
      $region39: #{tpu_custom_call.1} parent=5 // pred_region
        %s302 = ssub.s32 %s25, 1
        %s303 = sand.u32 %s52, 1
        %s304 = scalar_lea.sflag [#allocation3], %s303
        %s305 = sand.u32 %s52, 1
        %s306 = smul.addr %s305, 16
        %s307 = scalar_lea.vmem [#allocation2], %s306
        // Predicated region
        $region41: #{tpu_custom_call.1} parent=39 // pred_check
          %p308 = pneg %p65
        $region42: #{tpu_custom_call.1} parent=39 // pred_check_branch
          %310 = sbr.rel (%p308) target = $region44
        $region43: #{tpu_custom_call.1} parent=39 // pred_region
          %311 = dma.done %s304, 256
        $region44: #{tpu_custom_call.1} parent=39 // pred_fallthru
          _
        %s312 = sand.u32 %s30, 1
        %s313 = scalar_lea.sflag [#allocation6], %s312
        %s314 = sand.u32 %s78, 1
        %s315 = scalar_lea.vmem [#allocation5], %s314
        // Predicated region
        $region45: #{tpu_custom_call.1} parent=39 // pred_check
          %p316 = pneg %p91
        $region46: #{tpu_custom_call.1} parent=39 // pred_check_branch
          %318 = sbr.rel (%p316) target = $region48
        $region47: #{tpu_custom_call.1} parent=39 // pred_region
          %319 = dma.done %s313, 16
        $region48: #{tpu_custom_call.1} parent=39 // pred_fallthru
          _
        // Predicated region
        $region49: #{tpu_custom_call.1} parent=39 // pred_check
          %p320 = pneg %p138
        $region50: #{tpu_custom_call.1} parent=39 // pred_check_branch
          %322 = sbr.rel (%p320) target = $region52
        $region51: #{tpu_custom_call.1} parent=39 // pred_region
          %323 = dma.done [#allocation6], 3072
        $region52: #{tpu_custom_call.1} parent=39 // pred_fallthru
          _
        %s324 = sand.u32 %s52, 1
        %s325 = scalar_lea.sflag [#allocation3], %s324
        %s326 = sand.u32 %s52, 1
        %s327 = smul.addr %s326, 16
        %s328 = scalar_lea.vmem [#allocation2], %s327
        %p329 = pneg %p65
        %p330 = pneg %p62
        %s331 = sand.u32 %s30, 1
        %s332 = scalar_lea.sflag [#allocation6], %s331
        %s333 = sand.u32 %s78, 1
        %s334 = scalar_lea.vmem [#allocation5], %s333
        %p335 = pneg %p91
        %p336 = pneg %p88
        %p337 = scmp.lt.s32.totalorder %s34, 1
        %s338 = scalar_select %p337, %s34, 1
        %s339 = scalar_lea.vmem %s2, %s338
        %p340 = pneg %p117
        %p341 = pneg %p114
        %p342 = pneg %p138
        %p343 = pneg %p135
        %p344 = pneg %p159
        %p345 = pneg %p156
        %p346 = pneg %p187
        %p347 = pneg %p184
        %s348 = sand.u32 %s174, 1
        %s349 = scalar_lea.sflag [#allocation4], %s348
        %s350 = sand.u32 %s174, 1
        %s351 = smul.addr %s350, 16
        %s352 = scalar_lea.vmem [#allocation8], %s351
        %p353 = pneg %p215
        %p354 = pneg %p212
        %s355 = sand.u32 %s202, 1
        %s356 = scalar_lea.sflag [#allocation10], %s355
        %s357 = sand.u32 %s202, 1
        %s358 = smul.addr %s357, 48
        %s359 = scalar_lea.vmem [#allocation9], %s358
        %s360 = smul.u32 4, %s35
        %p361 = scmp.lt.s32.totalorder %s34, 1
        %s362 = scalar_select %p361, %s34, 1
        %s363 = scalar_lea.vmem %s2, %s362
        %s364 = smul.u32 4, %s35
        %s365 = smul.u32 4, %s35
        %v367 = vld [vmem:[%s307] sm:$0xf]
        %v368 = vld [vmem:[%s307 + $0x4] sm:$0xf]
        %v369 = vld [vmem:[%s307 + $0x8] sm:$0xf]
        %v370 = vld [vmem:[%s307 + $0xc] sm:$0xf]
        %v371 = vunpack.c.l.bf16 %v367
        %v372 = vunpack.c.l.bf16 %v368
        %v373 = vunpack.c.l.bf16 %v369
        %v374 = vunpack.c.l.bf16 %v370
        %v375 = vld [vmem:[%s315] sm:$0x1]
        %v377 = vlaneseq
        %v378 = vshrl.u32 %v377, 7
        %v379 = vsub.s32 0, %v378
        %v380 = vrot.slane %v375, %v379
        %v382 = vmul.f32 %v371, %v380
        %v383 = vmul.f32 %v372, %v380
        %v384 = vmul.f32 %v373, %v380
        %v385 = vmul.f32 %v374, %v380
        %v386 = vld [vmem:[%s363] sm:$0x1]
        %v388 = vlaneseq
        %v389 = vshrl.u32 %v388, 7
        %v390 = vsub.s32 0, %v389
        %v391 = vrot.slane %v386, %v390
        %v393 = vadd.f32 %v382, %v391
        %v394 = vadd.f32 %v383, %v391
        %v395 = vadd.f32 %v384, %v391
        %v396 = vadd.f32 %v385, %v391
        %v397 = vpack.c.bf16 %v394, %v393
        %v398 = vpack.c.bf16 %v396, %v395
        %v401 = vunpack.c.l.b16 %v397
        %v402 = vunpack.c.h.b16 %v397
        %v403 = vunpack.c.l.b16 %v398
        %v404 = vunpack.c.h.b16 %v398
        %v405 = vpack.c.b16 %v401, %v401
        %v406 = vpack.c.b16 %v402, %v402
        %v407 = vpack.c.b16 %v403, %v403
        %v408 = vpack.c.b16 %v404, %v404
        %413 = vst [vmem:[%s352] sm:$0xf] %v405
        %414 = vst [vmem:[%s352 + $0x4] sm:$0xf] %v406
        %415 = vst [vmem:[%s352 + $0x8] sm:$0xf] %v407
        %416 = vst [vmem:[%s352 + $0xc] sm:$0xf] %v408
        %v417 = vld [vmem:[#allocation7] sm:$0xff]
        %v418 = vld [vmem:[#allocation7 + $0x8] sm:$0xf]
        %v419 = vld [vmem:[#allocation7 + $0xc] sm:$0xff]
        %v420 = vld [vmem:[#allocation7 + $0x14] sm:$0xf]
        %v421 = vld [vmem:[#allocation7 + $0x18] sm:$0xff]
        %v422 = vld [vmem:[#allocation7 + $0x20] sm:$0xf]
        %v423 = vld [vmem:[#allocation7 + $0x24] sm:$0xff]
        %v424 = vld [vmem:[#allocation7 + $0x2c] sm:$0xf]
        %v425 = vld [vmem:[#allocation7 + $0x30] sm:$0xff]
        %v426 = vld [vmem:[#allocation7 + $0x38] sm:$0xf]
        %v427 = vld [vmem:[#allocation7 + $0x3c] sm:$0xff]
        %v428 = vld [vmem:[#allocation7 + $0x44] sm:$0xf]
        %v429 = vld [vmem:[#allocation7 + $0x48] sm:$0xff]
        %v430 = vld [vmem:[#allocation7 + $0x50] sm:$0xf]
        %v431 = vld [vmem:[#allocation7 + $0x54] sm:$0xff]
        %v432 = vld [vmem:[#allocation7 + $0x5c] sm:$0xf]
        %v433 = vld [vmem:[#allocation7 + $0x60] sm:$0xff]
        %v434 = vld [vmem:[#allocation7 + $0x68] sm:$0xf]
        %v435 = vld [vmem:[#allocation7 + $0x6c] sm:$0xff]
        %v436 = vld [vmem:[#allocation7 + $0x74] sm:$0xf]
        %v437 = vld [vmem:[#allocation7 + $0x78] sm:$0xff]
        %v438 = vld [vmem:[#allocation7 + $0x80] sm:$0xf]
        %v439 = vld [vmem:[#allocation7 + $0x84] sm:$0xff]
        %v440 = vld [vmem:[#allocation7 + $0x8c] sm:$0xf]
        %v441 = vld [vmem:[#allocation7 + $0x90] sm:$0xff]
        %v442 = vld [vmem:[#allocation7 + $0x98] sm:$0xf]
        %v443 = vld [vmem:[#allocation7 + $0x9c] sm:$0xff]
        %v444 = vld [vmem:[#allocation7 + $0xa4] sm:$0xf]
        %v445 = vld [vmem:[#allocation7 + $0xa8] sm:$0xff]
        %v446 = vld [vmem:[#allocation7 + $0xb0] sm:$0xf]
        %v447 = vld [vmem:[#allocation7 + $0xb4] sm:$0xff]
        %v448 = vld [vmem:[#allocation7 + $0xbc] sm:$0xf]
        %v449 = vld [vmem:[%s4] sm:$0x7]
        %v451 = vlaneseq
        %v452 = vshrl.u32 %v451, 7
        %v453 = vsub.s32 0, %v452
        %v454 = vrot.slane %v449, %v453
        %v455 = vlaneseq
        %v456 = vshrl.u32 %v455, 7
        %v457 = vsub.s32 1, %v456
        %v458 = vrot.slane %v449, %v457
        %v459 = vlaneseq
        %v460 = vshrl.u32 %v459, 7
        %v461 = vsub.s32 2, %v460
        %v462 = vrot.slane %v449, %v461
        %v498 = vunpack.c.l.b16 %v417
        %v499 = vunpack.c.h.b16 %v417
        %v500 = vunpack.c.l.b16 %v418
        %v501 = vunpack.c.l.b16 %v419
        %v502 = vunpack.c.h.b16 %v419
        %v503 = vunpack.c.l.b16 %v420
        %v504 = vunpack.c.l.b16 %v421
        %v505 = vunpack.c.h.b16 %v421
        %v506 = vunpack.c.l.b16 %v422
        %v507 = vunpack.c.l.b16 %v423
        %v508 = vunpack.c.h.b16 %v423
        %v509 = vunpack.c.l.b16 %v424
        %v510 = vunpack.c.l.b16 %v425
        %v511 = vunpack.c.h.b16 %v425
        %v512 = vunpack.c.l.b16 %v426
        %v513 = vunpack.c.l.b16 %v427
        %v514 = vunpack.c.h.b16 %v427
        %v515 = vunpack.c.l.b16 %v428
        %v516 = vunpack.c.l.b16 %v429
        %v517 = vunpack.c.h.b16 %v429
        %v518 = vunpack.c.l.b16 %v430
        %v519 = vunpack.c.l.b16 %v431
        %v520 = vunpack.c.h.b16 %v431
        %v521 = vunpack.c.l.b16 %v432
        %v522 = vunpack.c.l.b16 %v433
        %v523 = vunpack.c.h.b16 %v433
        %v524 = vunpack.c.l.b16 %v434
        %v525 = vunpack.c.l.b16 %v435
        %v526 = vunpack.c.h.b16 %v435
        %v527 = vunpack.c.l.b16 %v436
        %v528 = vunpack.c.l.b16 %v437
        %v529 = vunpack.c.h.b16 %v437
        %v530 = vunpack.c.l.b16 %v438
        %v531 = vunpack.c.l.b16 %v439
        %v532 = vunpack.c.h.b16 %v439
        %v533 = vunpack.c.l.b16 %v440
        %v534 = vunpack.c.l.b16 %v441
        %v535 = vunpack.c.h.b16 %v441
        %v536 = vunpack.c.l.b16 %v442
        %v537 = vunpack.c.l.b16 %v443
        %v538 = vunpack.c.h.b16 %v443
        %v539 = vunpack.c.l.b16 %v444
        %v540 = vunpack.c.l.b16 %v445
        %v541 = vunpack.c.h.b16 %v445
        %v542 = vunpack.c.l.b16 %v446
        %v543 = vunpack.c.l.b16 %v447
        %v544 = vunpack.c.h.b16 %v447
        %v545 = vunpack.c.l.b16 %v448
        %v546 = vpack.c.b16 %v501, %v498
        %v547 = vpack.c.b16 %v502, %v499
        %v548 = vpack.c.b16 %v503, %v500
        %v549 = vpack.c.b16 %v507, %v504
        %v550 = vpack.c.b16 %v508, %v505
        %v551 = vpack.c.b16 %v509, %v506
        %v552 = vpack.c.b16 %v513, %v510
        %v553 = vpack.c.b16 %v514, %v511
        %v554 = vpack.c.b16 %v515, %v512
        %v555 = vpack.c.b16 %v519, %v516
        %v556 = vpack.c.b16 %v520, %v517
        %v557 = vpack.c.b16 %v521, %v518
        %v558 = vpack.c.b16 %v525, %v522
        %v559 = vpack.c.b16 %v526, %v523
        %v560 = vpack.c.b16 %v527, %v524
        %v561 = vpack.c.b16 %v531, %v528
        %v562 = vpack.c.b16 %v532, %v529
        %v563 = vpack.c.b16 %v533, %v530
        %v564 = vpack.c.b16 %v537, %v534
        %v565 = vpack.c.b16 %v538, %v535
        %v566 = vpack.c.b16 %v539, %v536
        %v567 = vpack.c.b16 %v543, %v540
        %v568 = vpack.c.b16 %v544, %v541
        %v569 = vpack.c.b16 %v545, %v542
        %594 = vmatprep.subr.bf16.mxu0 %v568
        %595 = vmatpush1.bf16.msra.mxu0 %v567
        %596 = vmatprep.subr.bf16.mxu0 %v565
        %597 = vmatpush1.bf16.msra.mxu0 %v564
        %598 = vmatprep.subr.bf16.mxu0 %v562
        %599 = vmatpush1.bf16.msra.mxu0 %v561
        %600 = vmatprep.subr.bf16.mxu0 %v559
        %601 = vmatpush1.bf16.msra.mxu0 %v558
        %602 = vmatprep.subr.bf16.mxu0 %v556
        %603 = vmatpush1.bf16.msra.mxu0 %v555
        %604 = vmatprep.subr.bf16.mxu0 %v553
        %605 = vmatpush1.bf16.msra.mxu0 %v552
        %606 = vmatprep.subr.bf16.mxu0 %v550
        %607 = vmatpush1.bf16.msra.mxu0 %v549
        %608 = vmatprep.subr.bf16.mxu0 %v547
        %609 = vmatpush1.bf16.msra.mxu0 %v546
        %610 = vmatprep.subr.bf16.mxu0 0
        %611 = vmatpush2.bf16.msra.mxu0 0
        %612 = vmatprep.subr.bf16.mxu0 0
        %613 = vmatpush2.bf16.msra.mxu0 0
        %614 = vmatprep.subr.bf16.mxu0 0
        %615 = vmatpush2.bf16.msra.mxu0 0
        %616 = vmatprep.subr.bf16.mxu0 0
        %617 = vmatpush2.bf16.msra.mxu0 0
        %618 = vmatprep.subr.bf16.mxu0 0
        %619 = vmatpush2.bf16.msra.mxu0 0
        %620 = vmatprep.subr.bf16.mxu0 0
        %621 = vmatpush2.bf16.msra.mxu0 0
        %622 = vmatprep.subr.bf16.mxu0 0
        %623 = vmatpush2.bf16.msra.mxu0 0
        %624 = vmatprep.subr.bf16.mxu0 0
        %625 = vmatpush2.bf16.msra.mxu0 0
        %626 = vmatprep.mubr.bf16.mxu0 0
        %627 = vmatmul.mubr.bf16.gmra.mxu0 %v397
        %v628 = vpop.f32.mrf.mxu0
        %v629 = vadd.f32 %v454, %v628
        %v630 = vpop.f32.mrf.mxu0
        %v631 = vadd.f32 %v458, %v630
        %v632 = vpop.f32.mrf.mxu0
        %v633 = vadd.f32 %v454, %v632
        %v634 = vpop.f32.mrf.mxu0
        %v635 = vadd.f32 %v458, %v634
        %636 = vmatprep.mubr.bf16.mxu0 0
        %637 = vmatmul.mubr.bf16.gmra.mxu0 %v398
        %v638 = vpop.f32.mrf.mxu0
        %v639 = vadd.f32 %v454, %v638
        %v640 = vpop.f32.mrf.mxu0
        %v641 = vadd.f32 %v458, %v640
        %v642 = vpop.f32.mrf.mxu0
        %v643 = vadd.f32 %v454, %v642
        %v644 = vpop.f32.mrf.mxu0
        %v645 = vadd.f32 %v458, %v644
        %646 = vdwg.mxu0
        %647 = vmatprep.subr.bf16.mxu0 0
        %648 = vmatpush1.bf16.msra.mxu0 %v569
        %649 = vmatprep.subr.bf16.mxu0 0
        %650 = vmatpush1.bf16.msra.mxu0 %v566
        %651 = vmatprep.subr.bf16.mxu0 0
        %652 = vmatpush1.bf16.msra.mxu0 %v563
        %653 = vmatprep.subr.bf16.mxu0 0
        %654 = vmatpush1.bf16.msra.mxu0 %v560
        %655 = vmatprep.subr.bf16.mxu0 0
        %656 = vmatpush1.bf16.msra.mxu0 %v557
        %657 = vmatprep.subr.bf16.mxu0 0
        %658 = vmatpush1.bf16.msra.mxu0 %v554
        %659 = vmatprep.subr.bf16.mxu0 0
        %660 = vmatpush1.bf16.msra.mxu0 %v551
        %661 = vmatprep.subr.bf16.mxu0 0
        %662 = vmatpush1.bf16.msra.mxu0 %v548
        %663 = vmatprep.subr.bf16.mxu0 0
        %664 = vmatpush2.bf16.msra.mxu0 0
        %665 = vmatprep.subr.bf16.mxu0 0
        %666 = vmatpush2.bf16.msra.mxu0 0
        %667 = vmatprep.subr.bf16.mxu0 0
        %668 = vmatpush2.bf16.msra.mxu0 0
        %669 = vmatprep.subr.bf16.mxu0 0
        %670 = vmatpush2.bf16.msra.mxu0 0
        %671 = vmatprep.subr.bf16.mxu0 0
        %672 = vmatpush2.bf16.msra.mxu0 0
        %673 = vmatprep.subr.bf16.mxu0 0
        %674 = vmatpush2.bf16.msra.mxu0 0
        %675 = vmatprep.subr.bf16.mxu0 0
        %676 = vmatpush2.bf16.msra.mxu0 0
        %677 = vmatprep.subr.bf16.mxu0 0
        %678 = vmatpush2.bf16.msra.mxu0 0
        %679 = vmatprep.mubr.bf16.mxu0 0
        %680 = vmatmul.mubr.bf16.gmra.mxu0 %v397
        %v681 = vpop.f32.mrf.mxu0
        %v682 = vadd.f32 %v462, %v681
        %v683 = vpop.f32.mrf.mxu0
        %v684 = vpop.f32.mrf.mxu0
        %v685 = vadd.f32 %v462, %v684
        %v686 = vpop.f32.mrf.mxu0
        %687 = vmatprep.mubr.bf16.mxu0 0
        %688 = vmatmul.mubr.bf16.gmra.mxu0 %v398
        %v689 = vpop.f32.mrf.mxu0
        %v690 = vadd.f32 %v462, %v689
        %v691 = vpop.f32.mrf.mxu0
        %v692 = vpop.f32.mrf.mxu0
        %v693 = vadd.f32 %v462, %v692
        %v694 = vpop.f32.mrf.mxu0
        %695 = vdwg.mxu0
        %v696 = vpack.c.bf16 %v633, %v629
        %v697 = vpack.c.bf16 %v635, %v631
        %v698 = vpack.c.bf16 %v685, %v682
        %v699 = vpack.c.bf16 %v643, %v639
        %v700 = vpack.c.bf16 %v645, %v641
        %v701 = vpack.c.bf16 %v693, %v690
        %v708 = vunpack.c.l.b16 %v696
        %v709 = vunpack.c.l.b16 %v697
        %v710 = vunpack.c.l.b16 %v698
        %v711 = vunpack.c.h.b16 %v696
        %v712 = vunpack.c.h.b16 %v697
        %v713 = vunpack.c.h.b16 %v698
        %v714 = vunpack.c.l.b16 %v699
        %v715 = vunpack.c.l.b16 %v700
        %v716 = vunpack.c.l.b16 %v701
        %v717 = vunpack.c.h.b16 %v699
        %v718 = vunpack.c.h.b16 %v700
        %v719 = vunpack.c.h.b16 %v701
        %v720 = vpack.c.b16 %v709, %v708
        %v721 = vpack.c.b16 %v710, %v710
        %v722 = vpack.c.b16 %v712, %v711
        %v723 = vpack.c.b16 %v713, %v713
        %v724 = vpack.c.b16 %v715, %v714
        %v725 = vpack.c.b16 %v716, %v716
        %v726 = vpack.c.b16 %v718, %v717
        %v727 = vpack.c.b16 %v719, %v719
        %736 = vst [vmem:[%s359] sm:$0xff] %v720
        %737 = vst [vmem:[%s359 + $0x8] sm:$0xf] %v721
        %738 = vst [vmem:[%s359 + $0xc] sm:$0xff] %v722
        %739 = vst [vmem:[%s359 + $0x14] sm:$0xf] %v723
        %740 = vst [vmem:[%s359 + $0x18] sm:$0xff] %v724
        %741 = vst [vmem:[%s359 + $0x20] sm:$0xf] %v725
        %742 = vst [vmem:[%s359 + $0x24] sm:$0xff] %v726
        %743 = vst [vmem:[%s359 + $0x2c] sm:$0xf] %v727
        %s744 = sand.u32 %s174, 1
        %s745 = scalar_lea.sflag [#allocation4], %s744
        %s746 = sand.u32 %s174, 1
        %s747 = smul.addr %s746, 16
        %s748 = scalar_lea.vmem [#allocation8], %s747
        %s749 = sand.u32 %s202, 1
        %s750 = scalar_lea.sflag [#allocation10], %s749
        %s751 = sand.u32 %s202, 1
        %s752 = smul.addr %s751, 48
        %s753 = scalar_lea.vmem [#allocation9], %s752
        // Predicated region
        $region53: #{tpu_custom_call.1} parent=39 // pred_check
          %p754 = pneg %p184
        $region54: #{tpu_custom_call.1} parent=39 // pred_check_branch
          %756 = sbr.rel (%p754) target = $region56
        $region55: #{tpu_custom_call.1} parent=39 // pred_region
          %s757 = smul.u32 4, %s35
          %s759 = ssub.s32 256, 256
          %760 = vsyncadd %s745, %s759
          %s761 = smul.addr %s34, 8
          %s762 = sadd.s32 %s757, %s761
          %s763 = smul.addr %s762, 64
          %s764 = scalar_lea.hbm %s5, %s763
          %s765 = sshll.u32 %s748, 4
          %s766 = int_to_ptr.vmem [resolvable:$true] %s765
          %771 = dma.vmem_to_hbm [thread:$0]  %s766, 256, %s764, %s745, 64, 64, 4
        $region56: #{tpu_custom_call.1} parent=39 // pred_fallthru
          _
        // Predicated region
        $region57: #{tpu_custom_call.1} parent=39 // pred_check
          %p772 = pneg %p212
        $region58: #{tpu_custom_call.1} parent=39 // pred_check_branch
          %774 = sbr.rel (%p772) target = $region60
        $region59: #{tpu_custom_call.1} parent=39 // pred_region
          %s775 = smul.u32 4, %s35
          %s777 = ssub.s32 768, 768
          %778 = vsyncadd %s750, %s777
          %s779 = smul.addr %s775, 3
          %s780 = smul.addr %s34, 24
          %s781 = sadd.s32 %s779, %s780
          %s782 = smul.addr %s781, 64
          %s783 = scalar_lea.hbm %s6, %s782
          %s784 = sshll.u32 %s753, 4
          %s785 = int_to_ptr.vmem [resolvable:$true] %s784
          %790 = dma.vmem_to_hbm [thread:$0]  %s785, 768, %s783, %s750, 192, 192, 12
        $region60: #{tpu_custom_call.1} parent=39 // pred_fallthru
          _
      $region40: #{tpu_custom_call.1} parent=5 // pred_fallthru
        _
      %p791 = scmp.le.s32.totalorder 2, %s25
      // Predicated region
      $region61: #{tpu_custom_call.1} parent=5 // pred_check
        %p792 = pneg %p791
      $region62: #{tpu_custom_call.1} parent=5 // pred_check_branch
        %794 = sbr.rel (%p792) target = $region64
      $region63: #{tpu_custom_call.1} parent=5 // pred_region
        %s795 = ssub.s32 %s25, 2
        // Predicated region
        $region65: #{tpu_custom_call.1} parent=63 // pred_check
          %p796 = pneg %p190
        $region66: #{tpu_custom_call.1} parent=63 // pred_check_branch
          %798 = sbr.rel (%p796) target = $region68
        $region67: #{tpu_custom_call.1} parent=63 // pred_region
          %s799 = sand.u32 %s175, 1
          %s800 = scalar_lea.sflag [#allocation4], %s799
          %s801 = sand.u32 %s175, 1
          %s802 = smul.addr %s801, 16
          %s803 = scalar_lea.vmem [#allocation8], %s802
          %804 = dma.done %s800, 256
        $region68: #{tpu_custom_call.1} parent=63 // pred_fallthru
          _
        // Predicated region
        $region69: #{tpu_custom_call.1} parent=63 // pred_check
          %p805 = pneg %p218
        $region70: #{tpu_custom_call.1} parent=63 // pred_check_branch
          %807 = sbr.rel (%p805) target = $region72
        $region71: #{tpu_custom_call.1} parent=63 // pred_region
          %s808 = sand.u32 %s203, 1
          %s809 = scalar_lea.sflag [#allocation10], %s808
          %s810 = sand.u32 %s203, 1
          %s811 = smul.addr %s810, 48
          %s812 = scalar_lea.vmem [#allocation9], %s811
          %813 = dma.done %s809, 768
        $region72: #{tpu_custom_call.1} parent=63 // pred_fallthru
          _
      $region64: #{tpu_custom_call.1} parent=5 // pred_fallthru
        _
    $region6: #{tpu_custom_call.1} parent=1 // loop_footer
      %s29 = sadd.s32 1, %s25
    $region7: #{tpu_custom_call.1} parent=1 // loop_footer_branch
      %24 = sbr.rel target = $region3
    $region8: #{tpu_custom_call.1} parent=1 // loop_exit
      _
    %814 = vsyncpa [#allocation3], 1
    %s815 = scalar_lea.sflag [#allocation3], 1
    %816 = vsyncpa %s815, 1
    %817 = vsyncpa [#allocation6], 1
    %s818 = scalar_lea.sflag [#allocation6], 1
    %819 = vsyncpa %s818, 1
    %820 = vsyncpa [#allocation4], 1
    %s821 = scalar_lea.sflag [#allocation4], 1
    %822 = vsyncpa %s821, 1
    %823 = vsyncpa [#allocation10], 1
    %s824 = scalar_lea.sflag [#allocation10], 1
    %825 = vsyncpa %s824, 1

</llo_original>
